<compile_context>
chip_gen: v7x
topology: tpu7x:2x2x1
jax: 0.10.0
libtpu: 0.0.40
codegen_flags: <defaults>
</compile_context>

<pallas_src>
import functools

import jax
import jax.numpy as jnp
from jax import lax
from jax.experimental import pallas as pl
from jax.experimental.pallas import tpu as pltpu


def _round_up(x, m):
    return -(-x // m) * m


# --------------------------------------------------------------------------
# Single streaming pass:
#   BN-folded fc1 (matmul + shift) -> ReLU -> fused (fc21|fc22) matmul ->
#   softplus(+1e-7) on the scale half -> one lane-dense (TILE_M, 2*zd) store.
# --------------------------------------------------------------------------
def pzd_fused_kernel(d_ref, w1f_ref, shift_ref, wcat_ref, bcat_ref, out_ref):
    # fc1 with BatchNorm folded into the weights; fc1 bias omitted because the
    # BN mean subtraction cancels it exactly (stats computed consistently).
    hidden = jnp.maximum(
        jnp.dot(d_ref[...], w1f_ref[...], preferred_element_type=jnp.float32)
        + shift_ref[...],
        0.0,
    )

    # One MXU matmul for both heads: lanes [0, zd) -> loc, [zd, 2*zd) -> pre-softplus
    y = jnp.dot(hidden, wcat_ref[...], preferred_element_type=jnp.float32) + bcat_ref[...]

    zd = wcat_ref.shape[1] // 2
    # PyTorch Softplus: beta=1, threshold=20 (identity above 20), then +1e-7
    sp = jnp.where(y > 20.0, y, jnp.log1p(jnp.exp(jnp.minimum(y, 20.0)))) + 1e-7
    col = lax.broadcasted_iota(jnp.int32, y.shape, 1)
    out_ref[...] = jnp.where(col >= zd, sp, y)


# --------------------------------------------------------------------------
# One-time parameter preparation (outside jit): fuse the two head weights into
# a single lane-dense (zd, 2*zd) matrix so no per-call HBM concat is needed.
# --------------------------------------------------------------------------
def prepare_pzd_params(params):
    return dict(
        w1=params["w1"],                                                   # (d_dim, zd)
        gamma=params["gamma"],                                             # (1, zd)
        beta=params["beta"],                                               # (1, zd)
        w_cat=jnp.concatenate([params["w21"], params["w22"]], axis=1),     # (zd, 2*zd)
        b_cat=jnp.concatenate([params["b21"], params["b22"]], axis=1),     # (1, 2*zd)
    )


# --------------------------------------------------------------------------
# Wrapper mirroring pzd.forward(d) -> (zd_loc, zd_scale)
# --------------------------------------------------------------------------
@functools.partial(jax.jit, static_argnames=("max_tile_m",))
def pzd_forward(d, prep, max_tile_m=4096):
    if d.ndim <= 1:
        d = d[:, None]
    d = d.astype(jnp.float32)
    n, d_dim = d.shape
    zd_dim = prep["w1"].shape[1]

    # ---- BatchNorm batch statistics via the Gram trick (plain XLA) ---------
    # h = d @ w1 (+ b1).  BN subtracts the batch mean, so b1 cancels; we
    # therefore compute mean/var of d @ w1 directly from colsum(d) and d^T d,
    # both tiny (d_dim = 4) reductions that read d once from HBM.
    inv_n = 1.0 / float(max(n, 1))                     # guard n == 0
    colsum = jnp.sum(d, axis=0, keepdims=True)         # (1, d_dim)
    gram = d.T @ d                                      # (d_dim, d_dim)
    mean = (colsum @ prep["w1"]) * inv_n                # (1, zd)   E[d @ w1]
    e_h2 = jnp.einsum("aj,ab,bj->j", prep["w1"], gram, prep["w1"])[None, :] * inv_n
    var = e_h2 - mean * mean                            # biased variance (train mode)
    inv_std = lax.rsqrt(var + 1e-5)
    scale_row = prep["gamma"] * inv_std                 # (1, zd)
    shift_row = prep["beta"] - mean * scale_row         # (1, zd)
    w1_fold = prep["w1"] * scale_row                    # (d_dim, zd) BN folded into fc1

    # ---- batch tiling: multiple of 8 (f32 sublane), large tiles to amortize
    #      per-grid-step overhead; VMEM footprint stays ~17 MiB double-buffered.
    tile_m = min(max_tile_m, _round_up(n, 8))
    n_pad = _round_up(n, tile_m)
    if n_pad != n:
        # padded rows produce garbage output rows that are sliced off below;
        # BN statistics above were computed on the unpadded d, so they are exact.
        d = jnp.pad(d, ((0, n_pad - n), (0, 0)))
    num_tiles = n_pad // tile_m

    out = pl.pallas_call(
        pzd_fused_kernel,
        out_shape=jax.ShapeDtypeStruct((n_pad, 2 * zd_dim), jnp.float32),
        grid=(num_tiles,),
        in_specs=[
            pl.BlockSpec((tile_m, d_dim), lambda i: (i, 0)),
            pl.BlockSpec((d_dim, zd_dim), lambda i: (0, 0)),
            pl.BlockSpec((1, zd_dim), lambda i: (0, 0)),
            pl.BlockSpec((zd_dim, 2 * zd_dim), lambda i: (0, 0)),
            pl.BlockSpec((1, 2 * zd_dim), lambda i: (0, 0)),
        ],
        out_specs=pl.BlockSpec((tile_m, 2 * zd_dim), lambda i: (i, 0)),
        compiler_params=pltpu.CompilerParams(
            dimension_semantics=("parallel",),
            vmem_limit_bytes=32 * 1024 * 1024,
        ),
    )(d, w1_fold, shift_row, prep["w_cat"], prep["b_cat"])

    zd_loc = out[:n, :zd_dim]
    zd_scale = out[:n, zd_dim:]
    return zd_loc, zd_scale


# --------------------------------------------------------------------------
# Pure-JAX reference of the same math (faithful to the PyTorch module).
# --------------------------------------------------------------------------
def pzd_reference(d, params):
    if d.ndim <= 1:
        d = d[:, None]
    d = d.astype(jnp.float32)
    h = d @ params["w1"] + params["b1"]
    mean = jnp.mean(h, axis=0, keepdims=True)
    var = jnp.mean((h - mean) ** 2, axis=0, keepdims=True)
    h = (h - mean) / jnp.sqrt(var + 1e-5) * params["gamma"] + params["beta"]
    hidden = jnp.maximum(h, 0.0)
    loc = hidden @ params["w21"] + params["b21"]
    s = hidden @ params["w22"] + params["b22"]
    scale = jnp.where(s > 20.0, s, jnp.log1p(jnp.exp(jnp.minimum(s, 20.0)))) + 1e-7
    return loc, scale


def init_pzd_params(key, d_dim, zd_dim):
    """Shapes / init matching pzd.__init__ (xavier-uniform weights, zero
    biases for fc21/fc22, default-uniform bias for fc1, gamma=1 / beta=0)."""
    k1, k2, k3, kb = jax.random.split(key, 4)

    def xavier(k, fan_in, fan_out):
        a = (6.0 / (fan_in + fan_out)) ** 0.5
        # stored transposed: (in, out)
        return jax.random.uniform(k, (fan_in, fan_out), jnp.float32, -a, a)

    bound = 1.0 / (d_dim ** 0.5)
    return dict(
        w1=xavier(k1, d_dim, zd_dim),
        b1=jax.random.uniform(kb, (1, zd_dim), jnp.float32, -bound, bound),
        gamma=jnp.ones((1, zd_dim), jnp.float32),
        beta=jnp.zeros((1, zd_dim), jnp.float32),
        w21=xavier(k2, zd_dim, zd_dim),
        b21=jnp.zeros((1, zd_dim), jnp.float32),
        w22=xavier(k3, zd_dim, zd_dim),
        b22=jnp.zeros((1, zd_dim), jnp.float32),
    )


if __name__ == "__main__":
    # Small shapes consistent with the module:
    #   d_dim  = len(args.dis_type) - len(args.mask_att)  -> 4
    #   zd_dim = args.d_AE                                 -> 32
    batch, d_dim, zd_dim = 8, 4, 32

    key = jax.random.PRNGKey(0)
    k_param, k_d = jax.random.split(key)
    params = init_pzd_params(k_param, d_dim, zd_dim)
    prep = prepare_pzd_params(params)   # one-time head fusion, outside jit

    # domain vector `d` (batch, d_dim), as fed to pzd in GSNMSE3DIS.forward()
    d = jax.random.normal(k_d, (batch, d_dim), jnp.float32)

    zd_p_loc, zd_p_scale = pzd_forward(d, prep)
    jax.block_until_ready((zd_p_loc, zd_p_scale))

    ref_loc, ref_scale = pzd_reference(d, params)
    assert zd_p_loc.shape == (batch, zd_dim)
    assert zd_p_scale.shape == (batch, zd_dim)
    assert jnp.allclose(zd_p_loc, ref_loc, atol=2e-5, rtol=2e-5)
    assert jnp.allclose(zd_p_scale, ref_scale, atol=2e-5, rtol=2e-5)
    assert bool(jnp.all(zd_p_scale > 0.0))

    print("KERNEL_OK")
</pallas_src>

<mosaic_0001>
module attributes {stable_mosaic.version = 11 : i64} {
  func.func @pzd_fused_kernel(%arg0: i32, %arg1: memref<8x4xf32, #tpu.memory_space<vmem>>, %arg2: memref<4x32xf32, #tpu.memory_space<vmem>>, %arg3: memref<1x32xf32, #tpu.memory_space<vmem>>, %arg4: memref<32x64xf32, #tpu.memory_space<vmem>>, %arg5: memref<1x64xf32, #tpu.memory_space<vmem>>, %arg6: memref<8x64xf32, #tpu.memory_space<vmem>>) attributes {dimension_semantics = [#tpu.dimension_semantics<parallel>], iteration_bounds = array<i64: 1>, scalar_prefetch = 0 : i64, scratch_operands = 0 : i64, tpu.core_type = #tpu.core_type<tc>, window_params = [{transform_indices = @transform_0, window_bounds = array<i64: 8, 4>}, {pipeline_mode = #tpu.pipeline_mode<synchronous>, transform_indices = @transform_1, window_bounds = array<i64: 4, 32>}, {pipeline_mode = #tpu.pipeline_mode<synchronous>, transform_indices = @transform_2, window_bounds = array<i64: 1, 32>}, {pipeline_mode = #tpu.pipeline_mode<synchronous>, transform_indices = @transform_3, window_bounds = array<i64: 32, 64>}, {pipeline_mode = #tpu.pipeline_mode<synchronous>, transform_indices = @transform_4, window_bounds = array<i64: 1, 64>}, {transform_indices = @transform_5, window_bounds = array<i64: 8, 64>}]} {
    %c0 = arith.constant 0 : index
    %c0_0 = arith.constant 0 : index
    %0 = vector.load %arg1[%c0, %c0_0] : memref<8x4xf32, #tpu.memory_space<vmem>>, vector<8x4xf32>
    %c0_1 = arith.constant 0 : index
    %c0_2 = arith.constant 0 : index
    %1 = vector.load %arg2[%c0_1, %c0_2] : memref<4x32xf32, #tpu.memory_space<vmem>>, vector<4x32xf32>
    %cst = arith.constant dense<0.000000e+00> : vector<8x32xf32>
    %2 = tpu.matmul %0, %1, %cst {dimension_numbers = #tpu.dot_dimension_numbers<[1], [0], [0], [1], [0, 0, 1, 1], [], []>} : vector<8x4xf32>, vector<4x32xf32>, vector<8x32xf32> -> vector<8x32xf32>
    %c0_3 = arith.constant 0 : index
    %c0_4 = arith.constant 0 : index
    %3 = vector.load %arg3[%c0_3, %c0_4] : memref<1x32xf32, #tpu.memory_space<vmem>>, vector<1x32xf32>
    %4 = vector.broadcast %3 : vector<1x32xf32> to vector<8x32xf32>
    %5 = arith.addf %2, %4 : vector<8x32xf32>
    %cst_5 = arith.constant 0.000000e+00 : f32
    %6 = vector.broadcast %cst_5 : f32 to vector<8x32xf32>
    %7 = arith.maximumf %5, %6 : vector<8x32xf32>
    %c0_6 = arith.constant 0 : index
    %c0_7 = arith.constant 0 : index
    %8 = vector.load %arg4[%c0_6, %c0_7] : memref<32x64xf32, #tpu.memory_space<vmem>>, vector<32x64xf32>
    %cst_8 = arith.constant dense<0.000000e+00> : vector<8x64xf32>
    %9 = tpu.matmul %7, %8, %cst_8 {dimension_numbers = #tpu.dot_dimension_numbers<[1], [0], [0], [1], [0, 0, 1, 1], [], []>} : vector<8x32xf32>, vector<32x64xf32>, vector<8x64xf32> -> vector<8x64xf32>
    %c0_9 = arith.constant 0 : index
    %c0_10 = arith.constant 0 : index
    %10 = vector.load %arg5[%c0_9, %c0_10] : memref<1x64xf32, #tpu.memory_space<vmem>>, vector<1x64xf32>
    %11 = vector.broadcast %10 : vector<1x64xf32> to vector<8x64xf32>
    %12 = arith.addf %9, %11 : vector<8x64xf32>
    %cst_11 = arith.constant 2.000000e+01 : f32
    %13 = vector.broadcast %cst_11 : f32 to vector<8x64xf32>
    %14 = arith.cmpf ogt, %12, %13 : vector<8x64xf32>
    %cst_12 = arith.constant 2.000000e+01 : f32
    %15 = vector.broadcast %cst_12 : f32 to vector<8x64xf32>
    %16 = arith.minimumf %12, %15 : vector<8x64xf32>
    %17 = math.exp %16 : vector<8x64xf32>
    %18 = math.log1p %17 : vector<8x64xf32>
    %19 = arith.select %14, %12, %18 : vector<8x64xi1>, vector<8x64xf32>
    %cst_13 = arith.constant 1.000000e-07 : f32
    %20 = vector.broadcast %cst_13 : f32 to vector<8x64xf32>
    %21 = arith.addf %19, %20 : vector<8x64xf32>
    %22 = tpu.iota {dimensions = array<i32: 1>} : vector<8x64xi32>
    %c32_i32 = arith.constant 32 : i32
    %23 = vector.broadcast %c32_i32 : i32 to vector<8x64xi32>
    %24 = arith.cmpi sge, %22, %23 : vector<8x64xi32>
    %25 = arith.select %24, %21, %12 : vector<8x64xi1>, vector<8x64xf32>
    %c0_14 = arith.constant 0 : index
    %c0_15 = arith.constant 0 : index
    %26 = vector.load %arg6[%c0_14, %c0_15] : memref<8x64xf32, #tpu.memory_space<vmem>>, vector<8x64xf32>
    tpu.vector_store %arg6[%c0_14, %c0_15], %25 {strides = array<i32>} : memref<8x64xf32, #tpu.memory_space<vmem>>, vector<8x64xf32>,
    return
  }
  func.func @transform_0(%arg0: i32) -> (i32, i32) {
    %c0_i32 = arith.constant 0 : i32
    %c0_i32_0 = arith.constant 0 : i32
    return %arg0, %c0_i32 : i32, i32
  }
  func.func @transform_1(%arg0: i32) -> (i32, i32) {
    %c0_i32 = arith.constant 0 : i32
    %c0_i32_0 = arith.constant 0 : i32
    %c0_i32_1 = arith.constant 0 : i32
    return %c0_i32, %c0_i32_0 : i32, i32
  }
  func.func @transform_2(%arg0: i32) -> (i32, i32) {
    %c0_i32 = arith.constant 0 : i32
    %c0_i32_0 = arith.constant 0 : i32
    %c0_i32_1 = arith.constant 0 : i32
    return %c0_i32, %c0_i32_0 : i32, i32
  }
  func.func @transform_3(%arg0: i32) -> (i32, i32) {
    %c0_i32 = arith.constant 0 : i32
    %c0_i32_0 = arith.constant 0 : i32
    %c0_i32_1 = arith.constant 0 : i32
    return %c0_i32, %c0_i32_0 : i32, i32
  }
  func.func @transform_4(%arg0: i32) -> (i32, i32) {
    %c0_i32 = arith.constant 0 : i32
    %c0_i32_0 = arith.constant 0 : i32
    %c0_i32_1 = arith.constant 0 : i32
    return %c0_i32, %c0_i32_0 : i32, i32
  }
  func.func @transform_5(%arg0: i32) -> (i32, i32) {
    %c0_i32 = arith.constant 0 : i32
    %c0_i32_0 = arith.constant 0 : i32
    return %arg0, %c0_i32 : i32, i32
  }
}

</mosaic_0001>

<llo_original>
// kernel: pzd_forward.1
$region0: #{pzd_forward.1}
  #allocation0 [shape = 'u32[]', space=smem, size = 0x4, offset = 0x4, fixed_abs, tag = 'smem constant byte address 0x4 - core index']
  #allocation1 [shape = 'u32[144,128]{1,0:T(1,128)}', space=vmem, size = 0x12000, scoped, tag = 'internal scratch']
  %s0 = inlined_call_operand.vmem [shape: f32[8,4], index: 0, kind: input, shape index: {}]
  %s1 = inlined_call_operand.vmem [shape: f32[4,32], index: 1, kind: input, shape index: {}]
  %s2 = inlined_call_operand.vmem [shape: f32[1,32], index: 2, kind: input, shape index: {}]
  %s3 = inlined_call_operand.vmem [shape: f32[32,64], index: 3, kind: input, shape index: {}]
  %s4 = inlined_call_operand.vmem [shape: f32[1,64], index: 4, kind: input, shape index: {}]
  %s5 = inlined_call_operand.vmem [shape: f32[8,64], index: 5, kind: output, shape index: {}]
  %s6 = sld [smem:[#allocation0]]
  $region30: #{pzd_forward.1} parent=0
    _
  %s8 = ssub.s32 1, %s6
  %s9 = scalar_select 0, %s8, %s6
  // Predicated region
  $region2: #{pzd_forward.1} parent=0 // pred_check
    _
  $region3: #{pzd_forward.1} parent=0 // pred_check_branch
    %11 = sbr.rel (0) target = $region5
  $region4: #{pzd_forward.1} parent=0 // pred_region
    _
  $region5: #{pzd_forward.1} parent=0 // pred_fallthru
    _
  // Predicated region
  $region6: #{pzd_forward.1} parent=0 // pred_check
    _
  $region7: #{pzd_forward.1} parent=0 // pred_check_branch
    %13 = sbr.rel (0) target = $region9
  $region8: #{pzd_forward.1} parent=0 // pred_region
    _
  $region9: #{pzd_forward.1} parent=0 // pred_fallthru
    _
  // Predicated region
  $region10: #{pzd_forward.1} parent=0 // pred_check
    _
  $region11: #{pzd_forward.1} parent=0 // pred_check_branch
    %15 = sbr.rel (0) target = $region13
  $region12: #{pzd_forward.1} parent=0 // pred_region
    _
  $region13: #{pzd_forward.1} parent=0 // pred_fallthru
    _
  // Predicated region
  $region14: #{pzd_forward.1} parent=0 // pred_check
    _
  $region15: #{pzd_forward.1} parent=0 // pred_check_branch
    %17 = sbr.rel (0) target = $region17
  $region16: #{pzd_forward.1} parent=0 // pred_region
    _
  $region17: #{pzd_forward.1} parent=0 // pred_fallthru
    _
  // Predicated region
  $region18: #{pzd_forward.1} parent=0 // pred_check
    _
  $region19: #{pzd_forward.1} parent=0 // pred_check_branch
    %19 = sbr.rel (0) target = $region21
  $region20: #{pzd_forward.1} parent=0 // pred_region
    _
  $region21: #{pzd_forward.1} parent=0 // pred_fallthru
    _
  %v20 = vld [vmem:[%s0] sm:$0xff]
  %v21 = vld [vmem:[%s1] sm:$0xf]
  %v22 = vld [vmem:[%s2] sm:$0x1]
  %v24 = vlaneseq
  %v25 = vshrl.u32 %v24, 7
  %v26 = vsub.s32 0, %v25
  %v27 = vrot.slane %v22, %v26
  %vm29 = vcmask 31744
  %v31 = vsel %vm29, %v20, 0
  %vm33 = vcmask 1043456
  %v35 = vsel %vm33, %v21, 0
  %37 = vmatprep.subr.mxu0 0.0
  %38 = vmatpush1.msra.mxu0 %v35
  %39 = vmatprep.subr.mxu0 0.0
  %40 = vmatpush1.msra.mxu0 0.0
  %41 = vmatprep.subr.mxu0 0.0
  %42 = vmatpush1.msra.mxu0 0.0
  %43 = vmatprep.subr.mxu0 0.0
  %44 = vmatpush1.msra.mxu0 0.0
  %45 = vmatprep.subr.mxu0 0.0
  %46 = vmatpush1.msra.mxu0 0.0
  %47 = vmatprep.subr.mxu0 0.0
  %48 = vmatpush1.msra.mxu0 0.0
  %49 = vmatprep.subr.mxu0 0.0
  %50 = vmatpush1.msra.mxu0 0.0
  %51 = vmatprep.subr.mxu0 0.0
  %52 = vmatpush1.msra.mxu0 0.0
  %53 = vmatprep.subr.mxu0 0.0
  %54 = vmatpush1.msra.mxu0 0.0
  %55 = vmatprep.subr.mxu0 0.0
  %56 = vmatpush1.msra.mxu0 0.0
  %57 = vmatprep.subr.mxu0 0.0
  %58 = vmatpush1.msra.mxu0 0.0
  %59 = vmatprep.subr.mxu0 0.0
  %60 = vmatpush1.msra.mxu0 0.0
  %61 = vmatprep.subr.mxu0 0.0
  %62 = vmatpush1.msra.mxu0 0.0
  %63 = vmatprep.subr.mxu0 0.0
  %64 = vmatpush1.msra.mxu0 0.0
  %65 = vmatprep.subr.mxu0 0.0
  %66 = vmatpush1.msra.mxu0 0.0
  %67 = vmatprep.subr.mxu0 0.0
  %68 = vmatpush1.msra.mxu0 0.0
  %69 = vmatprep.subr.mxu0 0.0
  %70 = vmatpush1.msra.mxu0 0.0
  %71 = vmatprep.subr.mxu0 0.0
  %72 = vmatpush1.msra.mxu0 0.0
  %73 = vmatprep.subr.mxu0 0.0
  %74 = vmatpush1.msra.mxu0 0.0
  %75 = vmatprep.subr.mxu0 0.0
  %76 = vmatpush1.msra.mxu0 0.0
  %77 = vmatprep.subr.mxu0 0.0
  %78 = vmatpush1.msra.mxu0 0.0
  %79 = vmatprep.subr.mxu0 0.0
  %80 = vmatpush1.msra.mxu0 0.0
  %81 = vmatprep.subr.mxu0 0.0
  %82 = vmatpush1.msra.mxu0 0.0
  %83 = vmatprep.subr.mxu0 0.0
  %84 = vmatpush1.msra.mxu0 0.0
  %85 = vmatprep.subr.mxu0 0.0
  %86 = vmatpush1.msra.mxu0 0.0
  %87 = vmatprep.subr.mxu0 0.0
  %88 = vmatpush1.msra.mxu0 0.0
  %89 = vmatprep.subr.mxu0 0.0
  %90 = vmatpush1.msra.mxu0 0.0
  %91 = vmatprep.subr.mxu0 0.0
  %92 = vmatpush1.msra.mxu0 0.0
  %93 = vmatprep.subr.mxu0 0.0
  %94 = vmatpush1.msra.mxu0 0.0
  %95 = vmatprep.subr.mxu0 0.0
  %96 = vmatpush1.msra.mxu0 0.0
  %97 = vmatprep.subr.mxu0 0.0
  %98 = vmatpush1.msra.mxu0 0.0
  %99 = vmatprep.subr.mxu0 0.0
  %100 = vmatpush1.msra.mxu0 0.0
  %101 = vmatprep.mubr.f32.mxu0 0.0
  %102 = vmatmul.mubr.f32.gmra.mrb[0].mxu0 %v31
  %v103 = vpop.f32.mrb[0].mxu0
  %v104 = vadd.f32 %v27, %v103
  %v105 = vpop.f32.mrb[0].mxu0
  %106 = vdwg.mxu0
  %v107 = vmax.f32 %v104, 0.0
  %v108 = vld [vmem:[%s3] sm:$0xff]
  %v109 = vld [vmem:[%s3 + $0x8] sm:$0xff]
  %v110 = vld [vmem:[%s3 + $0x10] sm:$0xff]
  %v111 = vld [vmem:[%s3 + $0x18] sm:$0xff]
  %v112 = vld [vmem:[%s4] sm:$0x1]
  %v114 = vlaneseq
  %v115 = vshrl.u32 %v114, 7
  %v116 = vsub.s32 0, %v115
  %v117 = vrot.slane %v112, %v116
  %vm119 = vcmask 261120
  %v121 = vsel %vm119, %v107, 0
  %123 = vmatprep.subr.mxu0 0.0
  %124 = vmatpush1.msra.mxu0 %v108
  %125 = vmatprep.subr.mxu0 0.0
  %126 = vmatpush1.msra.mxu0 %v109
  %127 = vmatprep.subr.mxu0 0.0
  %128 = vmatpush1.msra.mxu0 %v110
  %129 = vmatprep.subr.mxu0 0.0
  %130 = vmatpush1.msra.mxu0 %v111
  %131 = vmatprep.subr.mxu0 0.0
  %132 = vmatpush1.msra.mxu0 0.0
  %133 = vmatprep.subr.mxu0 0.0
  %134 = vmatpush1.msra.mxu0 0.0
  %135 = vmatprep.subr.mxu0 0.0
  %136 = vmatpush1.msra.mxu0 0.0
  %137 = vmatprep.subr.mxu0 0.0
  %138 = vmatpush1.msra.mxu0 0.0
  %139 = vmatprep.subr.mxu0 0.0
  %140 = vmatpush1.msra.mxu0 0.0
  %141 = vmatprep.subr.mxu0 0.0
  %142 = vmatpush1.msra.mxu0 0.0
  %143 = vmatprep.subr.mxu0 0.0
  %144 = vmatpush1.msra.mxu0 0.0
  %145 = vmatprep.subr.mxu0 0.0
  %146 = vmatpush1.msra.mxu0 0.0
  %147 = vmatprep.subr.mxu0 0.0
  %148 = vmatpush1.msra.mxu0 0.0
  %149 = vmatprep.subr.mxu0 0.0
  %150 = vmatpush1.msra.mxu0 0.0
  %151 = vmatprep.subr.mxu0 0.0
  %152 = vmatpush1.msra.mxu0 0.0
  %153 = vmatprep.subr.mxu0 0.0
  %154 = vmatpush1.msra.mxu0 0.0
  %155 = vmatprep.subr.mxu0 0.0
  %156 = vmatpush1.msra.mxu0 0.0
  %157 = vmatprep.subr.mxu0 0.0
  %158 = vmatpush1.msra.mxu0 0.0
  %159 = vmatprep.subr.mxu0 0.0
  %160 = vmatpush1.msra.mxu0 0.0
  %161 = vmatprep.subr.mxu0 0.0
  %162 = vmatpush1.msra.mxu0 0.0
  %163 = vmatprep.subr.mxu0 0.0
  %164 = vmatpush1.msra.mxu0 0.0
  %165 = vmatprep.subr.mxu0 0.0
  %166 = vmatpush1.msra.mxu0 0.0
  %167 = vmatprep.subr.mxu0 0.0
  %168 = vmatpush1.msra.mxu0 0.0
  %169 = vmatprep.subr.mxu0 0.0
  %170 = vmatpush1.msra.mxu0 0.0
  %171 = vmatprep.subr.mxu0 0.0
  %172 = vmatpush1.msra.mxu0 0.0
  %173 = vmatprep.subr.mxu0 0.0
  %174 = vmatpush1.msra.mxu0 0.0
  %175 = vmatprep.subr.mxu0 0.0
  %176 = vmatpush1.msra.mxu0 0.0
  %177 = vmatprep.subr.mxu0 0.0
  %178 = vmatpush1.msra.mxu0 0.0
  %179 = vmatprep.subr.mxu0 0.0
  %180 = vmatpush1.msra.mxu0 0.0
  %181 = vmatprep.subr.mxu0 0.0
  %182 = vmatpush1.msra.mxu0 0.0
  %183 = vmatprep.subr.mxu0 0.0
  %184 = vmatpush1.msra.mxu0 0.0
  %185 = vmatprep.subr.mxu0 0.0
  %186 = vmatpush1.msra.mxu0 0.0
  %187 = vmatprep.mubr.f32.mxu0 0.0
  %188 = vmatmul.mubr.f32.gmra.mrb[0].mxu0 %v121
  %v189 = vpop.f32.mrb[0].mxu0
  %v190 = vadd.f32 %v117, %v189
  %v191 = vpop.f32.mrb[0].mxu0
  %192 = vdwg.mxu0
  %vm193 = vcmp.gt.f32.partialorder %v190, 20.0
  %v194 = vmin.f32 %v190, 20.0
  %v195 = vmul.f32 %v194, 1.442695
  %v196 = vpow.pop %v195
  %v197 = vadd.f32 %v196, 1.0
  %v198 = vlog2.pop %v197
  %v199 = vmul.f32 %v198, 0.6931472
  %v200 = vmul.f32 -0.5, %v196
  %v201 = vadd.f32 %v200, 1.0
  %v202 = vmul.f32 %v201, %v196
  %v203 = vand.u32 2147483647, %v196
  %vm204 = vcmp.lt.f32.partialorder %v203, 0.0004427343
  %v205 = vsel %vm204, %v202, %v199
  %v206 = vsel %vm193, %v190, %v205
  %v207 = vadd.f32 %v206, 1e-07
  %v208 = vlaneseq
  %v209 = vand.u32 %v208, 127
  %vm210 = vcmp.ge.s32.totalorder %v209, 32
  %v211 = vsel %vm210, %v207, %v190
  %vm212 = vcmask 523264
  %213 = vst.msk [vmem:[%s5] sm:$0xff] %vm212, %v211
  // Predicated region
  $region22: #{pzd_forward.1} parent=0 // pred_check
    _
  $region23: #{pzd_forward.1} parent=0 // pred_check_branch
    %215 = sbr.rel (0) target = $region25
  $region24: #{pzd_forward.1} parent=0 // pred_region
    _
  $region25: #{pzd_forward.1} parent=0 // pred_fallthru
    _
  // Predicated region
  $region26: #{pzd_forward.1} parent=0 // pred_check
    _
  $region27: #{pzd_forward.1} parent=0 // pred_check_branch
    %217 = sbr.rel (0) target = $region29
  $region28: #{pzd_forward.1} parent=0 // pred_region
    _
  $region29: #{pzd_forward.1} parent=0 // pred_fallthru
    _

</llo_original>
